<compile_context>
chip_gen: v5e
topology: v5e:2x2
jax: 0.10.0
libtpu: 0.0.40
codegen_flags: <defaults>
</compile_context>

<pallas_src>
import functools

import jax
import jax.numpy as jnp
from jax.experimental import pallas as pl
from jax.experimental.pallas import tpu as pltpu

_LANE = 128     # TPU lane width
_SUBLANE = 8    # TPU sublane width


def _round_up(x, m):
    return ((x + m - 1) // m) * m


def _hetero_scale_kernel(x_ref, w_ref, b_ref, o_ref, *, cast_to_bf16):
    # x_ref: [TM, d_model], w_ref: [d_model, c_pad], b_ref: [1, c_in], o_ref: [TM, c_in]
    x = x_ref[...]
    w = w_ref[...]
    if cast_to_bf16:
        # Optional: halve MXU passes (accumulation stays f32). Changes numerics
        # slightly vs. the f32 PyTorch reference, so it is opt-in.
        x = x.astype(jnp.bfloat16)
        w = w.astype(jnp.bfloat16)
    # MXU matmul, f32 accumulate, over the lane-padded weight slab.
    acc = jnp.dot(x, w, preferred_element_type=jnp.float32)      # [TM, c_pad]
    c = o_ref.shape[-1]
    # Static slice back to the real channel count (within the first lane tile),
    # bias add (VPU), exp (EUP), narrow masked store to HBM.
    o_ref[...] = jnp.exp(acc[:, :c] + b_ref[...]).astype(o_ref.dtype)


def conditional_heteroskedasticity(hidden_states, weight, bias, *,
                                   tm=1024, cast_to_bf16=False, min_grid_steps=8):
    """
    Args:
        hidden_states: [B, L, d_model]  (f32 or bf16)
        weight:        [d_model, c_in]  (transpose of PyTorch Linear.weight)
        bias:          [c_in]
        tm:            max row-tile size (rows of B*L per grid step)
        cast_to_bf16:  cast x/w to bf16 inside the kernel before the MXU matmul
        min_grid_steps: keep at least this many grid steps (megacore sharding)
    Returns:
        scale:         [B, L, c_in], each element > 0
    """
    B, L, d_model = hidden_states.shape
    d_w, c_in = weight.shape
    assert d_w == d_model, "weight must be [d_model, c_in]"
    M = B * L

    x_dtype = hidden_states.dtype
    out_dtype = x_dtype
    x_bytes = jnp.dtype(x_dtype).itemsize
    w_bytes = jnp.dtype(weight.dtype).itemsize
    o_bytes = jnp.dtype(out_dtype).itemsize

    # Pad ONLY the tiny weight's channel axis to a full MXU lane width; the big
    # activation and the output stay un-padded (no extra XLA pad/slice passes).
    c_pad = _round_up(c_in, _LANE)
    w_p = jnp.pad(weight, ((0, 0), (0, c_pad - c_in))) if c_pad != c_in else weight
    b2d = bias.reshape(1, c_in)

    # ---------------- tile-size selection ----------------
    try:
        vmem_cap = int(pltpu.get_tpu_info().vmem_capacity_bytes)
    except Exception:
        vmem_cap = 64 << 20  # conservative: v7x per-TensorCore VMEM

    # Keep enough grid steps so v7x's two TensorCores both get work.
    TM = min(int(tm), _round_up(pl.cdiv(M, min_grid_steps), _SUBLANE))

    # Fit double-buffered X/out tiles + resident (double-buffered) W, b in VMEM
    # with headroom below the per-generation capacity.
    fixed_bytes = 2 * d_model * c_pad * w_bytes + 2 * c_pad * 4 + (2 << 20)
    per_row_bytes = 2 * (d_model * x_bytes + c_in * o_bytes)
    budget = int(0.55 * vmem_cap)
    tm_vmem = max(_SUBLANE,
                  ((max(budget - fixed_bytes, per_row_bytes * _SUBLANE)
                    // per_row_bytes) // _SUBLANE) * _SUBLANE)
    TM = max(_SUBLANE, min(TM, tm_vmem))

    grid = (pl.cdiv(M, TM),)  # non-divisible M: last block clamped; rows independent

    footprint = fixed_bytes + TM * per_row_bytes
    vmem_limit = int(min(0.75 * vmem_cap, max(footprint + (4 << 20), 32 << 20)))

    x2d = hidden_states.reshape(M, d_model)  # contiguous reshape: free, no padding

    cost = pl.CostEstimate(
        flops=2 * M * d_model * c_pad,
        transcendentals=M * c_in,
        bytes_accessed=(x_bytes * M * d_model + w_bytes * d_model * c_pad
                        + o_bytes * M * c_in + 4 * c_in),
    )

    kernel = functools.partial(_hetero_scale_kernel, cast_to_bf16=cast_to_bf16)

    out = pl.pallas_call(
        kernel,
        out_shape=jax.ShapeDtypeStruct((M, c_in), out_dtype),
        grid_spec=pltpu.PrefetchScalarGridSpec(
            num_scalar_prefetch=0,
            grid=grid,
            in_specs=[
                # X: row-tiled, double-buffered by the Pallas pipeline.
                pl.BlockSpec((TM, d_model), lambda i: (i, 0)),
                # W / b: same block every step -> stay resident in VMEM.
                pl.BlockSpec((d_model, c_pad), lambda i: (0, 0)),
                pl.BlockSpec((1, c_in), lambda i: (0, 0)),
            ],
            # Narrow output: last block dim equals the full array extent (legal).
            out_specs=pl.BlockSpec((TM, c_in), lambda i: (i, 0)),
        ),
        compiler_params=pltpu.CompilerParams(
            dimension_semantics=("parallel",),   # independent M tiles -> megacore-shardable
            vmem_limit_bytes=vmem_limit,
        ),
        cost_estimate=cost,
    )(x2d, w_p, b2d)

    return out.reshape(B, L, c_in)


if __name__ == "__main__":
    # Small shapes consistent with the forward: B=2, L=8, d_model=32, c_in=4
    B, L, d_model, c_in = 2, 8, 32, 4

    key = jax.random.PRNGKey(0)
    k_x, k_w, k_b = jax.random.split(key, 3)

    hidden_states = jax.random.normal(k_x, (B, L, d_model), dtype=jnp.float32)

    # Deterministic parameter init mimicking nn.Linear's uniform(-1/sqrt(fan_in), 1/sqrt(fan_in))
    bound = 1.0 / (d_model ** 0.5)
    weight = jax.random.uniform(
        k_w, (d_model, c_in), dtype=jnp.float32, minval=-bound, maxval=bound
    )
    bias = jax.random.uniform(
        k_b, (c_in,), dtype=jnp.float32, minval=-bound, maxval=bound
    )

    scale = conditional_heteroskedasticity(hidden_states, weight, bias)
    scale = jax.block_until_ready(scale)

    # Reference check in plain JAX
    ref = jnp.exp(jnp.einsum("bld,dc->blc", hidden_states, weight) + bias)
    assert scale.shape == (B, L, c_in)
    assert bool(jnp.all(scale > 0))
    assert bool(jnp.allclose(scale, ref, rtol=1e-5, atol=1e-5))

    print("KERNEL_OK")
</pallas_src>

<mosaic_0001>
module attributes {stable_mosaic.version = 11 : i64} {
  func.func @_hetero_scale_kernel(%arg0: i32, %arg1: memref<8x32xf32, #tpu.memory_space<vmem>>, %arg2: memref<32x128xf32, #tpu.memory_space<vmem>>, %arg3: memref<1x4xf32, #tpu.memory_space<vmem>>, %arg4: memref<8x4xf32, #tpu.memory_space<vmem>>) attributes {dimension_semantics = [#tpu.dimension_semantics<parallel>], iteration_bounds = array<i64: 2>, scalar_prefetch = 0 : i64, scratch_operands = 0 : i64, tpu.core_type = #tpu.core_type<tc>, window_params = [{transform_indices = @transform_0, window_bounds = array<i64: 8, 32>}, {pipeline_mode = #tpu.pipeline_mode<synchronous>, transform_indices = @transform_1, window_bounds = array<i64: 32, 128>}, {pipeline_mode = #tpu.pipeline_mode<synchronous>, transform_indices = @transform_2, window_bounds = array<i64: 1, 4>}, {transform_indices = @transform_3, window_bounds = array<i64: 8, 4>}]} {
    %c0 = arith.constant 0 : index
    %c0_0 = arith.constant 0 : index
    %0 = vector.load %arg1[%c0, %c0_0] : memref<8x32xf32, #tpu.memory_space<vmem>>, vector<8x32xf32>
    %c0_1 = arith.constant 0 : index
    %c0_2 = arith.constant 0 : index
    %1 = vector.load %arg2[%c0_1, %c0_2] : memref<32x128xf32, #tpu.memory_space<vmem>>, vector<32x128xf32>
    %cst = arith.constant dense<0.000000e+00> : vector<8x128xf32>
    %2 = tpu.matmul %0, %1, %cst {dimension_numbers = #tpu.dot_dimension_numbers<[1], [0], [0], [1], [0, 0, 1, 1], [], []>} : vector<8x32xf32>, vector<32x128xf32>, vector<8x128xf32> -> vector<8x128xf32>
    %3 = vector.extract_strided_slice %2 {offsets = [0, 0], sizes = [8, 4], strides = [1, 1]} : vector<8x128xf32> to vector<8x4xf32>
    %c0_3 = arith.constant 0 : index
    %c0_4 = arith.constant 0 : index
    %4 = vector.load %arg3[%c0_3, %c0_4] : memref<1x4xf32, #tpu.memory_space<vmem>>, vector<1x4xf32>
    %5 = vector.broadcast %4 : vector<1x4xf32> to vector<8x4xf32>
    %6 = arith.addf %3, %5 : vector<8x4xf32>
    %7 = math.exp %6 : vector<8x4xf32>
    %c0_5 = arith.constant 0 : index
    %c0_6 = arith.constant 0 : index
    %8 = vector.load %arg4[%c0_5, %c0_6] : memref<8x4xf32, #tpu.memory_space<vmem>>, vector<8x4xf32>
    tpu.vector_store %arg4[%c0_5, %c0_6], %7 {strides = array<i32>} : memref<8x4xf32, #tpu.memory_space<vmem>>, vector<8x4xf32>,
    return
  }
  func.func @transform_0(%arg0: i32) -> (i32, i32) {
    %c0_i32 = arith.constant 0 : i32
    %c0_i32_0 = arith.constant 0 : i32
    return %arg0, %c0_i32 : i32, i32
  }
  func.func @transform_1(%arg0: i32) -> (i32, i32) {
    %c0_i32 = arith.constant 0 : i32
    %c0_i32_0 = arith.constant 0 : i32
    %c0_i32_1 = arith.constant 0 : i32
    return %c0_i32, %c0_i32_0 : i32, i32
  }
  func.func @transform_2(%arg0: i32) -> (i32, i32) {
    %c0_i32 = arith.constant 0 : i32
    %c0_i32_0 = arith.constant 0 : i32
    %c0_i32_1 = arith.constant 0 : i32
    return %c0_i32, %c0_i32_0 : i32, i32
  }
  func.func @transform_3(%arg0: i32) -> (i32, i32) {
    %c0_i32 = arith.constant 0 : i32
    %c0_i32_0 = arith.constant 0 : i32
    return %arg0, %c0_i32 : i32, i32
  }
}

</mosaic_0001>

<llo_original>
// kernel: tpu_custom_call.1
$region0: #{tpu_custom_call.1}
  #allocation0 [shape = 'u32[]', space=smem, size = 0x4, offset = 0x4, fixed_abs, tag = 'smem constant byte address 0x4 - core index']
  #allocation1 [shape = 'u32[72,128]{1,0:T(1,128)}', space=vmem, size = 0x9000, scoped, tag = 'internal scratch']
  %s0 = inlined_call_operand.hbm [shape: f32[16,32], index: 0, kind: input, shape index: {}]
  %s1 = inlined_call_operand.hbm [shape: f32[32,128], index: 1, kind: input, shape index: {}]
  %s2 = inlined_call_operand.vmem [shape: f32[1,4], index: 2, kind: input, shape index: {}]
  %s3 = inlined_call_operand.vmem [shape: f32[16,4], index: 3, kind: output, shape index: {}]
  %s4 = sld [smem:[#allocation0]]
  $region53: #{tpu_custom_call.1} parent=0
    _
  %s6 = ssub.s32 1, %s4
  %s7 = scalar_select 0, %s6, %s4
  $region1: #{tpu_custom_call.1} parent=0
    #allocation2 [shape = 'u8[8192]{0}', space=vmem, size = 0x2000, scoped, tag = 'input window, operand 0']
    #allocation3 [shape = 's32[2]{0}', space=sflag, size = 0x8, scoped, tag = 'scoped memory for tpu_custom_call.1']
    #allocation4 [shape = 'u8[16384]{0}', space=vmem, size = 0x4000, scoped, tag = 'input window, operand 1, single buffered']
    #allocation5 [shape = 's32[1]{0}', space=sflag, size = 0x4, scoped, tag = 'scoped memory for tpu_custom_call.1']
    %8 = vsyncpa [#allocation3], 0
    %s9 = scalar_lea.sflag [#allocation3], 1
    %10 = vsyncpa %s9, 0
    %11 = vsyncpa [#allocation5], 0
    loop: start=0, step=1, limit=4
    $region2: #{tpu_custom_call.1} parent=1 // loop_pre_header
      _
    $region3: #{tpu_custom_call.1} parent=1 // loop_header
      %s13 = sphi 0, %s17
      %p14 = scmp.ge.s32.totalorder %s13, 4
      %s23 = sphi 0, %s25
      %s26 = sphi 0, %s23
      %s27 = sphi 0, %s26
      %s43 = sphi 0, %s27
      %s47 = sphi 0, %s47
      %s49 = sphi 0, %s47
      %s50 = sphi 0, %s49
      %s64 = sphi 0, %s50
      %s68 = sphi 0, %s68
      %s70 = sphi 0, %s68
      %s71 = sphi 0, %s70
      %s85 = sphi 0, %s71
      %s91 = sphi 0, %s93
      %s94 = sphi 0, %s91
      %s95 = sphi 0, %s94
      %s111 = sphi 0, %s95
    $region4: #{tpu_custom_call.1} parent=1 // loop_header_branch
      %16 = sbr.rel (%p14) target = $region8
    $region5: #{tpu_custom_call.1} parent=1 // loop_body
      %s18 = ssub.s32 %s13, 1
      %s19 = ssub.s32 %s13, 2
      %s20 = sadd.s32 %s13, 1
      %s21 = ssub.s32 %s13, %s20
      %p22 = scmp.eq.s32.totalorder %s21, 0
      %s24 = sadd.s32 %s23, 1
      %s25 = scalar_select %p22, %s23, %s24
      %p28 = pneg %p22
      %p29 = scmp.eq.s32.totalorder %s13, 1
      %p30 = por %p28, %p29
      %p31 = scmp.ne.s32.totalorder %s23, %s26
      %p32 = scmp.eq.s32.totalorder %s13, 0
      %p33 = por %p31, %p32
      %p34 = scmp.ne.s32.totalorder %s23, %s26
      %p35 = scmp.eq.s32.totalorder %s18, 1
      %p36 = por %p34, %p35
      %p37 = scmp.ne.s32.totalorder %s26, %s27
      %p38 = scmp.eq.s32.totalorder %s18, 0
      %p39 = por %p37, %p38
      %p40 = scmp.ne.s32.totalorder %s26, %s27
      %p41 = scmp.eq.s32.totalorder %s19, 1
      %p42 = por %p40, %p41
      %p44 = scmp.ne.s32.totalorder %s27, %s43
      %p45 = scmp.eq.s32.totalorder %s19, 0
      %p46 = por %p44, %p45
      %s48 = sadd.s32 %s47, 1
      %p51 = scmp.eq.s32.totalorder %s13, 1
      %p52 = scmp.ne.s32.totalorder %s47, %s49
      %p53 = scmp.eq.s32.totalorder %s13, 0
      %p54 = por %p52, %p53
      %p55 = scmp.ne.s32.totalorder %s47, %s49
      %p56 = scmp.eq.s32.totalorder %s18, 1
      %p57 = por %p55, %p56
      %p58 = scmp.ne.s32.totalorder %s49, %s50
      %p59 = scmp.eq.s32.totalorder %s18, 0
      %p60 = por %p58, %p59
      %p61 = scmp.ne.s32.totalorder %s49, %s50
      %p62 = scmp.eq.s32.totalorder %s19, 1
      %p63 = por %p61, %p62
      %p65 = scmp.ne.s32.totalorder %s50, %s64
      %p66 = scmp.eq.s32.totalorder %s19, 0
      %p67 = por %p65, %p66
      %s69 = sadd.s32 %s68, 1
      %p72 = scmp.eq.s32.totalorder %s13, 1
      %p73 = scmp.ne.s32.totalorder %s68, %s70
      %p74 = scmp.eq.s32.totalorder %s13, 0
      %p75 = por %p73, %p74
      %p76 = scmp.ne.s32.totalorder %s68, %s70
      %p77 = scmp.eq.s32.totalorder %s18, 1
      %p78 = por %p76, %p77
      %p79 = scmp.ne.s32.totalorder %s70, %s71
      %p80 = scmp.eq.s32.totalorder %s18, 0
      %p81 = por %p79, %p80
      %p82 = scmp.ne.s32.totalorder %s70, %s71
      %p83 = scmp.eq.s32.totalorder %s19, 1
      %p84 = por %p82, %p83
      %p86 = scmp.ne.s32.totalorder %s71, %s85
      %p87 = scmp.eq.s32.totalorder %s19, 0
      %p88 = por %p86, %p87
      %s89 = ssub.s32 %s13, %s20
      %p90 = scmp.eq.s32.totalorder %s89, 0
      %s92 = sadd.s32 %s91, 1
      %s93 = scalar_select %p90, %s91, %s92
      %p96 = pneg %p90
      %p97 = scmp.eq.s32.totalorder %s13, 1
      %p98 = por %p96, %p97
      %p99 = scmp.ne.s32.totalorder %s91, %s94
      %p100 = scmp.eq.s32.totalorder %s13, 0
      %p101 = por %p99, %p100
      %p102 = scmp.ne.s32.totalorder %s91, %s94
      %p103 = scmp.eq.s32.totalorder %s18, 1
      %p104 = por %p102, %p103
      %p105 = scmp.ne.s32.totalorder %s94, %s95
      %p106 = scmp.eq.s32.totalorder %s18, 0
      %p107 = por %p105, %p106
      %p108 = scmp.ne.s32.totalorder %s94, %s95
      %p109 = scmp.eq.s32.totalorder %s19, 1
      %p110 = por %p108, %p109
      %p112 = scmp.ne.s32.totalorder %s95, %s111
      %p113 = scmp.eq.s32.totalorder %s19, 0
      %p114 = por %p112, %p113
      %p115 = scmp.le.s32.totalorder 1, %s13
      %p116 = scmp.lt.s32.totalorder %s13, 3
      %p117 = pnand %p115, %p116
      %p118 = pneg %p117
      // Predicated region
      $region9: #{tpu_custom_call.1} parent=5 // pred_check
        _
      $region10: #{tpu_custom_call.1} parent=5 // pred_check_branch
        %120 = sbr.rel (%p117) target = $region12
      $region11: #{tpu_custom_call.1} parent=5 // pred_region
        %s121 = ssub.s32 %s13, 1
        // Predicated region
        $region13: #{tpu_custom_call.1} parent=11 // pred_check
          %p122 = pneg %p60
        $region14: #{tpu_custom_call.1} parent=11 // pred_check_branch
          %124 = sbr.rel (%p122) target = $region16
        $region15: #{tpu_custom_call.1} parent=11 // pred_region
          %126 = vsyncadd [#allocation5], 0
          %s127 = sshll.u32 %s1, 4
          %s128 = int_to_ptr.hbm [resolvable:$true] %s127
          %s129 = sshll.u32 [#allocation4], 4
          %s130 = int_to_ptr.vmem [resolvable:$true] %s129
          %135 = dma.hbm_to_vmem [thread:$0]  %s128, 512, %s130, [#allocation5], 128, 128, 8
        $region16: #{tpu_custom_call.1} parent=11 // pred_fallthru
          _
        // Predicated region
        $region17: #{tpu_custom_call.1} parent=11 // pred_check
          %p136 = pneg %p81
        $region18: #{tpu_custom_call.1} parent=11 // pred_check_branch
          %138 = sbr.rel (%p136) target = $region20
        $region19: #{tpu_custom_call.1} parent=11 // pred_region
          _
        $region20: #{tpu_custom_call.1} parent=11 // pred_fallthru
          _
      $region12: #{tpu_custom_call.1} parent=5 // pred_fallthru
        _
      %p139 = scmp.lt.s32.totalorder %s13, 2
      // Predicated region
      $region21: #{tpu_custom_call.1} parent=5 // pred_check
        %p140 = pneg %p139
      $region22: #{tpu_custom_call.1} parent=5 // pred_check_branch
        %142 = sbr.rel (%p140) target = $region24
      $region23: #{tpu_custom_call.1} parent=5 // pred_region
        // Predicated region
        $region25: #{tpu_custom_call.1} parent=23 // pred_check
          %p143 = pneg %p33
        $region26: #{tpu_custom_call.1} parent=23 // pred_check_branch
          %145 = sbr.rel (%p143) target = $region28
        $region27: #{tpu_custom_call.1} parent=23 // pred_region
          %s146 = sand.u32 %s23, 1
          %s147 = scalar_lea.sflag [#allocation3], %s146
          %s148 = sand.u32 %s23, 1
          %s149 = smul.addr %s148, 8
          %s150 = scalar_lea.vmem [#allocation2], %s149
          %152 = vsyncadd %s147, 0
          %s153 = smul.addr %s13, 8
          %s154 = scalar_lea.hbm %s0, %s153
          %s156 = sshll.u32 %s154, 4
          %s157 = int_to_ptr.hbm [resolvable:$true] %s156
          %s158 = sshll.u32 %s150, 4
          %s159 = int_to_ptr.vmem [resolvable:$true] %s158
          %161 = dma.hbm_to_vmem [thread:$0]  %s157, 128, %s159, %s147
        $region28: #{tpu_custom_call.1} parent=23 // pred_fallthru
          _
      $region24: #{tpu_custom_call.1} parent=5 // pred_fallthru
        _
      %p162 = scmp.le.s32.totalorder 1, %s13
      %p163 = scmp.lt.s32.totalorder %s13, 3
      %p164 = pnand %p162, %p163
      %p165 = pneg %p164
      // Predicated region
      $region29: #{tpu_custom_call.1} parent=5 // pred_check
        _
      $region30: #{tpu_custom_call.1} parent=5 // pred_check_branch
        %167 = sbr.rel (%p164) target = $region32
      $region31: #{tpu_custom_call.1} parent=5 // pred_region
        %s168 = ssub.s32 %s13, 1
        %s169 = sand.u32 %s26, 1
        %s170 = scalar_lea.sflag [#allocation3], %s169
        %s171 = sand.u32 %s26, 1
        %s172 = smul.addr %s171, 8
        %s173 = scalar_lea.vmem [#allocation2], %s172
        // Predicated region
        $region33: #{tpu_custom_call.1} parent=31 // pred_check
          %p174 = pneg %p39
        $region34: #{tpu_custom_call.1} parent=31 // pred_check_branch
          %176 = sbr.rel (%p174) target = $region36
        $region35: #{tpu_custom_call.1} parent=31 // pred_region
          %178 = dma.done %s170, 128
        $region36: #{tpu_custom_call.1} parent=31 // pred_fallthru
          _
        // Predicated region
        $region37: #{tpu_custom_call.1} parent=31 // pred_check
          %p179 = pneg %p60
        $region38: #{tpu_custom_call.1} parent=31 // pred_check_branch
          %181 = sbr.rel (%p179) target = $region40
        $region39: #{tpu_custom_call.1} parent=31 // pred_region
          %183 = dma.done [#allocation5], 512
        $region40: #{tpu_custom_call.1} parent=31 // pred_fallthru
          _
        %s184 = sand.u32 %s26, 1
        %s185 = scalar_lea.sflag [#allocation3], %s184
        %s186 = sand.u32 %s26, 1
        %s187 = smul.addr %s186, 8
        %s188 = scalar_lea.vmem [#allocation2], %s187
        %p189 = pneg %p39
        %p190 = pneg %p36
        %p191 = pneg %p60
        %p192 = pneg %p57
        %p193 = pneg %p81
        %p194 = pneg %p78
        %p195 = pneg %p107
        %p196 = pneg %p104
        %p197 = scmp.lt.s32.totalorder %s18, 1
        %s198 = scalar_select %p197, %s18, 1
        %s199 = smul.addr %s198, 8
        %s200 = scalar_lea.vmem %s3, %s199
        %p201 = scmp.lt.s32.totalorder %s18, 1
        %s202 = scalar_select %p201, %s18, 1
        %s203 = smul.addr %s202, 8
        %s204 = scalar_lea.vmem %s3, %s203
        %v205 = vld [vmem:[%s173] sm:$0xff]
        %v206 = vld [vmem:[#allocation4] sm:$0xff]
        %v207 = vld [vmem:[#allocation4 + $0x8] sm:$0xff]
        %v208 = vld [vmem:[#allocation4 + $0x10] sm:$0xff]
        %v209 = vld [vmem:[#allocation4 + $0x18] sm:$0xff]
        %vm210 = vcmask 261120
        %v212 = vsel %vm210, %v205, 0
        %214 = vmatpush.msra.mxu0 0.0
        %215 = vmatpush.msra.mxu0 0.0
        %216 = vmatpush.msra.mxu0 0.0
        %217 = vmatpush.msra.mxu0 0.0
        %218 = vmatpush.msra.mxu0 0.0
        %219 = vmatpush.msra.mxu0 0.0
        %220 = vmatpush.msra.mxu0 0.0
        %221 = vmatpush.msra.mxu0 0.0
        %222 = vmatpush.msra.mxu0 0.0
        %223 = vmatpush.msra.mxu0 0.0
        %224 = vmatpush.msra.mxu0 0.0
        %225 = vmatpush.msra.mxu0 0.0
        %226 = vmatpush.msra.mxu0 %v209
        %227 = vmatpush.msra.mxu0 %v208
        %228 = vmatpush.msra.mxu0 %v207
        %229 = vmatpush.msra.mxu0 %v206
        %230 = vmatmul.f32.gmra.mxu0 %v212
        %v231 = vpop.f32.mrf.mxu0
        %v232 = vadd.f32 0.0, %v231
        %233 = vdwg.mxu0
        %v234 = vld [vmem:[%s2] sm:$0x1]
        %v236 = vperm.slane %v234, 0
        %v238 = vadd.f32 %v232, %v236
        %v239 = vmul.f32 %v238, 1.442695
        %v240 = vpow.pop %v239
        %vm241 = vcmask 31744
        %242 = vst.msk [vmem:[%s204] sm:$0xff] %vm241, %v240
        %p243 = scmp.lt.s32.totalorder %s18, 1
        %s244 = scalar_select %p243, %s18, 1
        %s245 = smul.addr %s244, 8
        %s246 = scalar_lea.vmem %s3, %s245
        // Predicated region
        $region41: #{tpu_custom_call.1} parent=31 // pred_check
          %p247 = pneg %p104
        $region42: #{tpu_custom_call.1} parent=31 // pred_check_branch
          %249 = sbr.rel (%p247) target = $region44
        $region43: #{tpu_custom_call.1} parent=31 // pred_region
          _
        $region44: #{tpu_custom_call.1} parent=31 // pred_fallthru
          _
      $region32: #{tpu_custom_call.1} parent=5 // pred_fallthru
        _
      %p250 = scmp.le.s32.totalorder 2, %s13
      // Predicated region
      $region45: #{tpu_custom_call.1} parent=5 // pred_check
        %p251 = pneg %p250
      $region46: #{tpu_custom_call.1} parent=5 // pred_check_branch
        %253 = sbr.rel (%p251) target = $region48
      $region47: #{tpu_custom_call.1} parent=5 // pred_region
        %s254 = ssub.s32 %s13, 2
        // Predicated region
        $region49: #{tpu_custom_call.1} parent=47 // pred_check
          %p255 = pneg %p110
        $region50: #{tpu_custom_call.1} parent=47 // pred_check_branch
          %257 = sbr.rel (%p255) target = $region52
        $region51: #{tpu_custom_call.1} parent=47 // pred_region
          %p258 = scmp.lt.s32.totalorder %s19, 1
          %s259 = scalar_select %p258, %s19, 1
          %s260 = smul.addr %s259, 8
          %s261 = scalar_lea.vmem %s3, %s260
        $region52: #{tpu_custom_call.1} parent=47 // pred_fallthru
          _
      $region48: #{tpu_custom_call.1} parent=5 // pred_fallthru
        _
    $region6: #{tpu_custom_call.1} parent=1 // loop_footer
      %s17 = sadd.s32 1, %s13
    $region7: #{tpu_custom_call.1} parent=1 // loop_footer_branch
      %12 = sbr.rel target = $region3
    $region8: #{tpu_custom_call.1} parent=1 // loop_exit
      _
    %262 = vsyncpa [#allocation3], 1
    %s263 = scalar_lea.sflag [#allocation3], 1
    %264 = vsyncpa %s263, 1
    %265 = vsyncpa [#allocation5], 1

</llo_original>
